<compile_context>
chip_gen: v7x
topology: tpu7x:2x2x1
jax: 0.10.0
libtpu: 0.0.40
codegen_flags: <defaults>
</compile_context>

<pallas_src>
import functools

import jax
import jax.numpy as jnp
import numpy as np
from jax.experimental import pallas as pl
from jax.experimental.pallas import tpu as pltpu

EPSILON = 1e-5
_LANES = 128


def _stats_kernel(x_ref, mean_ref, var_ref, count_ref,
                  new_mean_ref, new_var_ref,
                  sum_acc, sq_acc,
                  *, n_valid_rows, feat, fold, batch_count):
    """Accumulate shifted sums over batch tiles; Chan-update running stats at the end."""
    t = pl.program_id(0)

    @pl.when(t == 0)
    def _init():
        sum_acc[...] = jnp.zeros_like(sum_acc)
        sq_acc[...] = jnp.zeros_like(sq_acc)

    c = mean_ref[...]                       # (1, FL) running mean (tiled) as numeric shift
    d = x_ref[...] - c                      # (TR, FL)

    tr = d.shape[0]
    row = t * tr + jax.lax.broadcasted_iota(jnp.int32, (1, tr), 1)
    w = (row < n_valid_rows).astype(jnp.float32)          # (1, TR) valid-row weights

    # MXU row-reduction: one pass over x gives both sum(d) and sum(d*d); padded rows
    # are zero-weighted, so they never pollute the statistics.
    sum_acc[...] += jnp.dot(w, d, preferred_element_type=jnp.float32)
    sq_acc[...] += jnp.dot(w, d * d, preferred_element_type=jnp.float32)

    @pl.when(t == pl.num_programs(0) - 1)
    def _finalize():
        s = sum_acc[...]
        q = sq_acc[...]
        # Combine the `fold` interleaved lane groups with an XLU roll add-tree.
        # (fold is always a power of two; after log2(fold) steps every lane group
        #  holds the total, so the result stays replicated across groups.)
        shift = feat
        while shift < feat * fold:
            s = s + pltpu.roll(s, shift=shift, axis=1)
            q = q + pltpu.roll(q, shift=shift, axis=1)
            shift *= 2

        n = jnp.float32(batch_count)
        batch_mean = c + s / n
        # Unbiased batch variance (torch.Tensor.var default), via shifted moments.
        batch_var = (q - s * s / n) / (n - 1.0)

        mean = mean_ref[...]
        var = var_ref[...]
        count = count_ref[0]

        # Chan et al. parallel-moments update (same math as the PyTorch module).
        delta = batch_mean - mean
        tot = count + n
        new_mean = mean + delta * n / tot
        m2 = var * count + batch_var * n + delta * delta * count * n / tot
        new_mean_ref[...] = new_mean
        new_var_ref[...] = m2 / tot


def _normalize_kernel(x_ref, mean_ref, var_ref, y_ref, *, eps):
    inv = jax.lax.rsqrt(var_ref[...] + eps)
    y_ref[...] = (x_ref[...] - mean_ref[...]) * inv


def running_mean_std_forward(x, running_mean, running_var, count,
                             *, epsilon=EPSILON, training=True,
                             row_tile=256, donate_x=False):
    """x: (B, F); running_mean/var: (F,); count: scalar.
    Returns (y, new_running_mean, new_running_var, new_count)."""
    B, F = x.shape
    x = x.astype(jnp.float32)

    # --- lane folding: pack `fold` batch rows side by side to fill all 128 lanes ---
    fold = 1
    if F <= _LANES and _LANES % F == 0 and B % (_LANES // F) == 0:
        fold = _LANES // F
    FL = F * fold
    R = B // fold
    x_f = x.reshape(R, FL)

    mean2d = jnp.tile(running_mean.astype(jnp.float32).reshape(1, F), (1, fold))
    var2d = jnp.tile(running_var.astype(jnp.float32).reshape(1, F), (1, fold))
    count1d = jnp.asarray(count, jnp.float32).reshape(1)

    # --- row tiling for a pipelined grid over the batch ---
    if R <= row_tile:
        TR = max(8, ((R + 7) // 8) * 8)      # single tile, sublane-aligned
    else:
        TR = row_tile                        # multiple of 8
    R_pad = ((R + TR - 1) // TR) * TR
    if R_pad != R:
        x_f = jnp.pad(x_f, ((0, R_pad - R), (0, 0)))
    num_tiles = R_pad // TR

    tile_bytes = TR * FL * 4
    vmem_limit = int(min(max(6 * tile_bytes + 64 * FL * 4, 32 << 20), 48 << 20))

    smem = pl.BlockSpec(memory_space=pltpu.MemorySpace.SMEM)

    if training:
        stats_kernel = functools.partial(
            _stats_kernel, n_valid_rows=R, feat=F, fold=fold, batch_count=float(B))
        new_mean2d, new_var2d = pl.pallas_call(
            stats_kernel,
            out_shape=(
                jax.ShapeDtypeStruct((1, FL), jnp.float32),
                jax.ShapeDtypeStruct((1, FL), jnp.float32),
            ),
            grid_spec=pltpu.PrefetchScalarGridSpec(
                num_scalar_prefetch=0,
                grid=(num_tiles,),
                in_specs=[
                    pl.BlockSpec((TR, FL), lambda t: (t, 0)),
                    pl.BlockSpec((1, FL), lambda t: (0, 0)),
                    pl.BlockSpec((1, FL), lambda t: (0, 0)),
                    smem,
                ],
                out_specs=(
                    pl.BlockSpec((1, FL), lambda t: (0, 0)),
                    pl.BlockSpec((1, FL), lambda t: (0, 0)),
                ),
                scratch_shapes=[
                    pltpu.VMEM((1, FL), jnp.float32),
                    pltpu.VMEM((1, FL), jnp.float32),
                ],
            ),
            compiler_params=pltpu.CompilerParams(
                dimension_semantics=("arbitrary",),
                vmem_limit_bytes=vmem_limit),
        )(x_f, mean2d, var2d, count1d)
        new_count = (jnp.asarray(count, jnp.float32) + jnp.float32(B))
    else:
        new_mean2d, new_var2d = mean2d, var2d
        new_count = jnp.asarray(count, jnp.float32)

    norm_kernel = functools.partial(_normalize_kernel, eps=float(epsilon))
    y_f = pl.pallas_call(
        norm_kernel,
        out_shape=jax.ShapeDtypeStruct((R_pad, FL), jnp.float32),
        grid_spec=pltpu.PrefetchScalarGridSpec(
            num_scalar_prefetch=0,
            grid=(num_tiles,),
            in_specs=[
                pl.BlockSpec((TR, FL), lambda t: (t, 0)),
                pl.BlockSpec((1, FL), lambda t: (0, 0)),
                pl.BlockSpec((1, FL), lambda t: (0, 0)),
            ],
            out_specs=pl.BlockSpec((TR, FL), lambda t: (t, 0)),
        ),
        compiler_params=pltpu.CompilerParams(
            dimension_semantics=("parallel",),
            vmem_limit_bytes=vmem_limit),
        input_output_aliases=({0: 0} if donate_x else {}),
    )(x_f, new_mean2d, new_var2d)

    y = y_f[:R].reshape(B, F)
    new_mean = new_mean2d[0, :F]
    new_var = new_var2d[0, :F]
    return y, new_mean, new_var, new_count


def _reference(x, running_mean, running_var, count, eps=EPSILON):
    x = np.asarray(x, np.float64)
    mean = np.asarray(running_mean, np.float64)
    var = np.asarray(running_var, np.float64)
    count = float(count)
    b = x.shape[0]
    bm = x.mean(axis=0)
    bv = x.var(axis=0, ddof=1)
    delta = bm - mean
    tot = count + b
    new_mean = mean + delta * b / tot
    m2 = var * count + bv * b + delta ** 2 * count * b / tot
    new_var = m2 / tot
    y = (x - new_mean.astype(np.float32)) / np.sqrt(new_var.astype(np.float32) + eps)
    return y.astype(np.float32), new_mean, new_var, tot


if __name__ == "__main__":
    insize = 32       # feature dim ("hidden")
    batch = 8

    key = jax.random.PRNGKey(0)
    x = jax.random.normal(key, (batch, insize), dtype=jnp.float32) * 2.0 + 0.5

    # Deterministic buffer init, as in __init__: zeros / ones / count=1
    running_mean = jnp.zeros((insize,), jnp.float32)
    running_var = jnp.ones((insize,), jnp.float32)
    count = jnp.float32(1.0)

    y, nm, nv, nc = running_mean_std_forward(x, running_mean, running_var, count)
    jax.block_until_ready((y, nm, nv, nc))

    y_ref, nm_ref, nv_ref, nc_ref = _reference(np.asarray(x), np.asarray(running_mean),
                                               np.asarray(running_var), float(count))

    assert np.allclose(np.asarray(y), y_ref, rtol=1e-4, atol=1e-4)
    assert np.allclose(np.asarray(nm), nm_ref, rtol=1e-4, atol=1e-4)
    assert np.allclose(np.asarray(nv), nv_ref, rtol=1e-4, atol=1e-4)
    assert np.allclose(float(nc), nc_ref)

    print("KERNEL_OK")
</pallas_src>

<mosaic_0001>
module attributes {stable_mosaic.version = 11 : i64} {
  func.func @_stats_kernel(%arg0: i32, %arg1: memref<8x128xf32, #tpu.memory_space<vmem>>, %arg2: memref<1x128xf32, #tpu.memory_space<vmem>>, %arg3: memref<1x128xf32, #tpu.memory_space<vmem>>, %arg4: memref<1xf32, #tpu.memory_space<smem>>, %arg5: memref<1x128xf32, #tpu.memory_space<vmem>>, %arg6: memref<1x128xf32, #tpu.memory_space<vmem>>, %arg7: memref<1x128xf32, #tpu.memory_space<vmem>>, %arg8: memref<1x128xf32, #tpu.memory_space<vmem>>) attributes {dimension_semantics = [#tpu.dimension_semantics<arbitrary>], iteration_bounds = array<i64: 1>, scalar_prefetch = 0 : i64, scratch_operands = 2 : i64, tpu.core_type = #tpu.core_type<tc>, window_params = [{transform_indices = @transform_0, window_bounds = array<i64: 8, 128>}, {pipeline_mode = #tpu.pipeline_mode<synchronous>, transform_indices = @transform_1, window_bounds = array<i64: 1, 128>}, {pipeline_mode = #tpu.pipeline_mode<synchronous>, transform_indices = @transform_2, window_bounds = array<i64: 1, 128>}, {transform_indices = @transform_3, window_bounds = array<i64: 1>}, {pipeline_mode = #tpu.pipeline_mode<synchronous>, transform_indices = @transform_4, window_bounds = array<i64: 1, 128>}, {pipeline_mode = #tpu.pipeline_mode<synchronous>, transform_indices = @transform_5, window_bounds = array<i64: 1, 128>}]} {
    %c0_i32 = arith.constant 0 : i32
    %0 = arith.cmpi eq, %arg0, %c0_i32 : i32
    %1 = arith.extui %0 : i1 to i32
    %c0_i32_0 = arith.constant 0 : i32
    %2 = arith.cmpi ne, %1, %c0_i32_0 : i32
    scf.if %2 {
      %cst_15 = arith.constant 0.000000e+00 : f32
      %27 = vector.broadcast %cst_15 : f32 to vector<1x128xf32>
      %c0_16 = arith.constant 0 : index
      %c0_17 = arith.constant 0 : index
      %28 = vector.load %arg7[%c0_16, %c0_17] : memref<1x128xf32, #tpu.memory_space<vmem>>, vector<1x128xf32>
      tpu.vector_store %arg7[%c0_16, %c0_17], %27 {strides = array<i32>} : memref<1x128xf32, #tpu.memory_space<vmem>>, vector<1x128xf32>,
      %cst_18 = arith.constant 0.000000e+00 : f32
      %29 = vector.broadcast %cst_18 : f32 to vector<1x128xf32>
      %c0_19 = arith.constant 0 : index
      %c0_20 = arith.constant 0 : index
      %30 = vector.load %arg8[%c0_19, %c0_20] : memref<1x128xf32, #tpu.memory_space<vmem>>, vector<1x128xf32>
      tpu.vector_store %arg8[%c0_19, %c0_20], %29 {strides = array<i32>} : memref<1x128xf32, #tpu.memory_space<vmem>>, vector<1x128xf32>,
    } else {
    }
    %c0 = arith.constant 0 : index
    %c0_1 = arith.constant 0 : index
    %3 = vector.load %arg2[%c0, %c0_1] : memref<1x128xf32, #tpu.memory_space<vmem>>, vector<1x128xf32>
    %c0_2 = arith.constant 0 : index
    %c0_3 = arith.constant 0 : index
    %4 = vector.load %arg1[%c0_2, %c0_3] : memref<8x128xf32, #tpu.memory_space<vmem>>, vector<8x128xf32>
    %5 = vector.broadcast %3 : vector<1x128xf32> to vector<8x128xf32>
    %6 = arith.subf %4, %5 : vector<8x128xf32>
    %c8_i32 = arith.constant 8 : i32
    %7 = arith.muli %arg0, %c8_i32 : i32
    %8 = tpu.iota {dimensions = array<i32: 1>} : vector<1x8xi32>
    %9 = vector.broadcast %7 : i32 to vector<1x8xi32>
    %10 = arith.addi %9, %8 : vector<1x8xi32>
    %c2_i32 = arith.constant 2 : i32
    %11 = vector.broadcast %c2_i32 : i32 to vector<1x8xi32>
    %12 = arith.cmpi slt, %10, %11 : vector<1x8xi32>
    %13 = arith.extui %12 : vector<1x8xi1> to vector<1x8xi32>
    %14 = arith.sitofp %13 : vector<1x8xi32> to vector<1x8xf32>
    %c0_4 = arith.constant 0 : index
    %c0_5 = arith.constant 0 : index
    %15 = vector.load %arg7[%c0_4, %c0_5] : memref<1x128xf32, #tpu.memory_space<vmem>>, vector<1x128xf32>
    %cst = arith.constant dense<0.000000e+00> : vector<1x128xf32>
    %16 = tpu.matmul %14, %6, %cst {dimension_numbers = #tpu.dot_dimension_numbers<[1], [0], [0], [1], [0, 0, 1, 1], [], []>} : vector<1x8xf32>, vector<8x128xf32>, vector<1x128xf32> -> vector<1x128xf32>
    %17 = arith.addf %15, %16 : vector<1x128xf32>
    %c0_6 = arith.constant 0 : index
    %c0_7 = arith.constant 0 : index
    %18 = vector.load %arg7[%c0_6, %c0_7] : memref<1x128xf32, #tpu.memory_space<vmem>>, vector<1x128xf32>
    tpu.vector_store %arg7[%c0_6, %c0_7], %17 {strides = array<i32>} : memref<1x128xf32, #tpu.memory_space<vmem>>, vector<1x128xf32>,
    %c0_8 = arith.constant 0 : index
    %c0_9 = arith.constant 0 : index
    %19 = vector.load %arg8[%c0_8, %c0_9] : memref<1x128xf32, #tpu.memory_space<vmem>>, vector<1x128xf32>
    %20 = arith.mulf %6, %6 : vector<8x128xf32>
    %cst_10 = arith.constant dense<0.000000e+00> : vector<1x128xf32>
    %21 = tpu.matmul %14, %20, %cst_10 {dimension_numbers = #tpu.dot_dimension_numbers<[1], [0], [0], [1], [0, 0, 1, 1], [], []>} : vector<1x8xf32>, vector<8x128xf32>, vector<1x128xf32> -> vector<1x128xf32>
    %22 = arith.addf %19, %21 : vector<1x128xf32>
    %c0_11 = arith.constant 0 : index
    %c0_12 = arith.constant 0 : index
    %23 = vector.load %arg8[%c0_11, %c0_12] : memref<1x128xf32, #tpu.memory_space<vmem>>, vector<1x128xf32>
    tpu.vector_store %arg8[%c0_11, %c0_12], %22 {strides = array<i32>} : memref<1x128xf32, #tpu.memory_space<vmem>>, vector<1x128xf32>,
    %c0_i32_13 = arith.constant 0 : i32
    %24 = arith.cmpi eq, %arg0, %c0_i32_13 : i32
    %25 = arith.extui %24 : i1 to i32
    %c0_i32_14 = arith.constant 0 : i32
    %26 = arith.cmpi ne, %25, %c0_i32_14 : i32
    scf.if %26 {
      %c0_15 = arith.constant 0 : index
      %c0_16 = arith.constant 0 : index
      %27 = vector.load %arg7[%c0_15, %c0_16] : memref<1x128xf32, #tpu.memory_space<vmem>>, vector<1x128xf32>
      %c0_17 = arith.constant 0 : index
      %c0_18 = arith.constant 0 : index
      %28 = vector.load %arg8[%c0_17, %c0_18] : memref<1x128xf32, #tpu.memory_space<vmem>>, vector<1x128xf32>
      %c32_i32 = arith.constant 32 : i32
      %29 = tpu.dynamic_rotate %27 by %c32_i32 dim 1 : vector<1x128xf32>, i32 -> vector<1x128xf32>
      %30 = arith.addf %27, %29 : vector<1x128xf32>
      %c32_i32_19 = arith.constant 32 : i32
      %31 = tpu.dynamic_rotate %28 by %c32_i32_19 dim 1 : vector<1x128xf32>, i32 -> vector<1x128xf32>
      %32 = arith.addf %28, %31 : vector<1x128xf32>
      %c64_i32 = arith.constant 64 : i32
      %33 = tpu.dynamic_rotate %30 by %c64_i32 dim 1 : vector<1x128xf32>, i32 -> vector<1x128xf32>
      %34 = arith.addf %30, %33 : vector<1x128xf32>
      %c64_i32_20 = arith.constant 64 : i32
      %35 = tpu.dynamic_rotate %32 by %c64_i32_20 dim 1 : vector<1x128xf32>, i32 -> vector<1x128xf32>
      %36 = arith.addf %32, %35 : vector<1x128xf32>
      %cst_21 = arith.constant 8.000000e+00 : f32
      %37 = vector.broadcast %cst_21 : f32 to vector<1x128xf32>
      %38 = arith.divf %34, %37 : vector<1x128xf32>
      %39 = arith.addf %3, %38 : vector<1x128xf32>
      %40 = arith.mulf %34, %34 : vector<1x128xf32>
      %cst_22 = arith.constant 8.000000e+00 : f32
      %41 = vector.broadcast %cst_22 : f32 to vector<1x128xf32>
      %42 = arith.divf %40, %41 : vector<1x128xf32>
      %43 = arith.subf %36, %42 : vector<1x128xf32>
      %cst_23 = arith.constant 8.000000e+00 : f32
      %cst_24 = arith.constant 1.000000e+00 : f32
      %44 = arith.subf %cst_23, %cst_24 : f32
      %45 = vector.broadcast %44 : f32 to vector<1x128xf32>
      %46 = arith.divf %43, %45 : vector<1x128xf32>
      %c0_25 = arith.constant 0 : index
      %c0_26 = arith.constant 0 : index
      %47 = vector.load %arg2[%c0_25, %c0_26] : memref<1x128xf32, #tpu.memory_space<vmem>>, vector<1x128xf32>
      %c0_27 = arith.constant 0 : index
      %c0_28 = arith.constant 0 : index
      %48 = vector.load %arg3[%c0_27, %c0_28] : memref<1x128xf32, #tpu.memory_space<vmem>>, vector<1x128xf32>
      %c0_29 = arith.constant 0 : index
      %49 = memref.load %arg4[%c0_29] : memref<1xf32, #tpu.memory_space<smem>>
      %50 = arith.subf %39, %47 : vector<1x128xf32>
      %cst_30 = arith.constant 8.000000e+00 : f32
      %51 = arith.addf %49, %cst_30 : f32
      %cst_31 = arith.constant 8.000000e+00 : f32
      %52 = vector.broadcast %cst_31 : f32 to vector<1x128xf32>
      %53 = arith.mulf %50, %52 : vector<1x128xf32>
      %54 = vector.broadcast %51 : f32 to vector<1x128xf32>
      %55 = arith.divf %53, %54 : vector<1x128xf32>
      %56 = arith.addf %47, %55 : vector<1x128xf32>
      %57 = vector.broadcast %49 : f32 to vector<1x128xf32>
      %58 = arith.mulf %48, %57 : vector<1x128xf32>
      %cst_32 = arith.constant 8.000000e+00 : f32
      %59 = vector.broadcast %cst_32 : f32 to vector<1x128xf32>
      %60 = arith.mulf %46, %59 : vector<1x128xf32>
      %61 = arith.addf %58, %60 : vector<1x128xf32>
      %62 = arith.mulf %50, %50 : vector<1x128xf32>
      %63 = vector.broadcast %49 : f32 to vector<1x128xf32>
      %64 = arith.mulf %62, %63 : vector<1x128xf32>
      %cst_33 = arith.constant 8.000000e+00 : f32
      %65 = vector.broadcast %cst_33 : f32 to vector<1x128xf32>
      %66 = arith.mulf %64, %65 : vector<1x128xf32>
      %67 = vector.broadcast %51 : f32 to vector<1x128xf32>
      %68 = arith.divf %66, %67 : vector<1x128xf32>
      %69 = arith.addf %61, %68 : vector<1x128xf32>
      %c0_34 = arith.constant 0 : index
      %c0_35 = arith.constant 0 : index
      %70 = vector.load %arg5[%c0_34, %c0_35] : memref<1x128xf32, #tpu.memory_space<vmem>>, vector<1x128xf32>
      tpu.vector_store %arg5[%c0_34, %c0_35], %56 {strides = array<i32>} : memref<1x128xf32, #tpu.memory_space<vmem>>, vector<1x128xf32>,
      %71 = vector.broadcast %51 : f32 to vector<1x128xf32>
      %72 = arith.divf %69, %71 : vector<1x128xf32>
      %c0_36 = arith.constant 0 : index
      %c0_37 = arith.constant 0 : index
      %73 = vector.load %arg6[%c0_36, %c0_37] : memref<1x128xf32, #tpu.memory_space<vmem>>, vector<1x128xf32>
      tpu.vector_store %arg6[%c0_36, %c0_37], %72 {strides = array<i32>} : memref<1x128xf32, #tpu.memory_space<vmem>>, vector<1x128xf32>,
    } else {
    }
    return
  }
  func.func @transform_0(%arg0: i32) -> (i32, i32) {
    %c0_i32 = arith.constant 0 : i32
    %c0_i32_0 = arith.constant 0 : i32
    return %arg0, %c0_i32 : i32, i32
  }
  func.func @transform_1(%arg0: i32) -> (i32, i32) {
    %c0_i32 = arith.constant 0 : i32
    %c0_i32_0 = arith.constant 0 : i32
    %c0_i32_1 = arith.constant 0 : i32
    return %c0_i32, %c0_i32_0 : i32, i32
  }
  func.func @transform_2(%arg0: i32) -> (i32, i32) {
    %c0_i32 = arith.constant 0 : i32
    %c0_i32_0 = arith.constant 0 : i32
    %c0_i32_1 = arith.constant 0 : i32
    return %c0_i32, %c0_i32_0 : i32, i32
  }
  func.func @transform_3(%arg0: i32) -> i32 {
    %c0_i32 = arith.constant 0 : i32
    %c0_i32_0 = arith.constant 0 : i32
    return %c0_i32 : i32
  }
  func.func @transform_4(%arg0: i32) -> (i32, i32) {
    %c0_i32 = arith.constant 0 : i32
    %c0_i32_0 = arith.constant 0 : i32
    %c0_i32_1 = arith.constant 0 : i32
    return %c0_i32, %c0_i32_0 : i32, i32
  }
  func.func @transform_5(%arg0: i32) -> (i32, i32) {
    %c0_i32 = arith.constant 0 : i32
    %c0_i32_0 = arith.constant 0 : i32
    %c0_i32_1 = arith.constant 0 : i32
    return %c0_i32, %c0_i32_0 : i32, i32
  }
}

</mosaic_0001>

<llo_original>
// kernel: tpu_custom_call.1
$region0: #{tpu_custom_call.1}
  #allocation0 [shape = 'u32[]', space=smem, size = 0x4, offset = 0x4, fixed_abs, tag = 'smem constant byte address 0x4 - core index']
  #allocation1 [shape = 'u32[144,128]{1,0:T(1,128)}', space=vmem, size = 0x12000, scoped, tag = 'internal scratch']
  #allocation2 [shape = 'f32[1,128]{1,0:T(1,128)}', space=vmem, size = 0x200, scoped, tag = 'scratch operand']
  #allocation3 [shape = 'f32[1,128]{1,0:T(1,128)}', space=vmem, size = 0x200, scoped, tag = 'scratch operand']
  #allocation4 [shape = 'f32[1]{0:T(128)S(6)}', space=smem, size = 0x200, scoped, tag = 'scoped memory for tpu_custom_call.1']
  %s0 = inlined_call_operand.hbm [shape: f32[8,128], index: 0, kind: input, shape index: {}]
  %s1 = inlined_call_operand.vmem [shape: f32[1,128], index: 1, kind: input, shape index: {}]
  %s2 = inlined_call_operand.vmem [shape: f32[1,128], index: 2, kind: input, shape index: {}]
  %s3 = inlined_call_operand.<no memory space> [shape: f32[1], index: 3, kind: input, shape index: {}]
  %s4 = inlined_call_operand.hbm [shape: f32[1,128], index: 4, kind: output, shape index: {0}]
  %s5 = inlined_call_operand.hbm [shape: f32[1,128], index: 5, kind: output, shape index: {1}]
  %6 = xla_tuple %s4, %s5
  %s7 = sld [smem:[#allocation0]]
  $region46: #{tpu_custom_call.1} parent=0
    _
  %s9 = ssub.s32 1, %s7
  %s10 = scalar_select 0, %s9, %s7
  %11 = sst [smem:[#allocation4]] %s3
  $region1: #{tpu_custom_call.1} parent=0
    #allocation5 [shape = 'u8[4096]{0}', space=vmem, size = 0x1000, scoped, tag = 'input window, operand 0, single buffered']
    #allocation6 [shape = 's32[1]{0}', space=sflag, size = 0x4, scoped, tag = 'scoped memory for tpu_custom_call.1']
    #allocation7 [shape = 's32[1]{0}', space=sflag, size = 0x4, scoped, tag = 'scoped memory for tpu_custom_call.1']
    #allocation8 [shape = 'u8[512]{0}', space=vmem, size = 0x400, scoped, tag = 'output window, operand 0, single buffered']
    #allocation9 [shape = 'u8[512]{0}', space=vmem, size = 0x400, scoped, tag = 'output window, operand 1, single buffered']
    #allocation10 [shape = 's32[1]{0}', space=sflag, size = 0x4, scoped, tag = 'scoped memory for tpu_custom_call.1']
    %12 = vsyncpa [#allocation6], 0
    %13 = vsyncpa [#allocation7], 0
    %14 = vsyncpa [#allocation10], 0
    // Predicated region
    $region2: #{tpu_custom_call.1} parent=1 // pred_check
      _
    $region3: #{tpu_custom_call.1} parent=1 // pred_check_branch
      %16 = sbr.rel (0) target = $region5
    $region4: #{tpu_custom_call.1} parent=1 // pred_region
      %s18 = ssub.s32 128, 128
      %19 = vsyncadd [#allocation6], %s18
      %s21 = sshll.u32 [#allocation5], 4
      %s22 = int_to_ptr.vmem [resolvable:$true] %s21
      %24 = dma.hbm_to_vmem [thread:$0]  %s0, 128, %s22, [#allocation6]
    $region5: #{tpu_custom_call.1} parent=1 // pred_fallthru
      _
    // Predicated region
    $region6: #{tpu_custom_call.1} parent=1 // pred_check
      _
    $region7: #{tpu_custom_call.1} parent=1 // pred_check_branch
      %26 = sbr.rel (0) target = $region9
    $region8: #{tpu_custom_call.1} parent=1 // pred_region
      _
    $region9: #{tpu_custom_call.1} parent=1 // pred_fallthru
      _
    // Predicated region
    $region10: #{tpu_custom_call.1} parent=1 // pred_check
      _
    $region11: #{tpu_custom_call.1} parent=1 // pred_check_branch
      %28 = sbr.rel (0) target = $region13
    $region12: #{tpu_custom_call.1} parent=1 // pred_region
      _
    $region13: #{tpu_custom_call.1} parent=1 // pred_fallthru
      _
    // Predicated region
    $region14: #{tpu_custom_call.1} parent=1 // pred_check
      _
    $region15: #{tpu_custom_call.1} parent=1 // pred_check_branch
      %30 = sbr.rel (0) target = $region17
    $region16: #{tpu_custom_call.1} parent=1 // pred_region
      _
    $region17: #{tpu_custom_call.1} parent=1 // pred_fallthru
      _
    // Predicated region
    $region18: #{tpu_custom_call.1} parent=1 // pred_check
      _
    $region19: #{tpu_custom_call.1} parent=1 // pred_check_branch
      %32 = sbr.rel (0) target = $region21
    $region20: #{tpu_custom_call.1} parent=1 // pred_region
      %33 = dma.done [#allocation6], 128
    $region21: #{tpu_custom_call.1} parent=1 // pred_fallthru
      _
    %p34 = scmp.eq.s32.totalorder 0, 0
    // Predicated region
    $region22: #{tpu_custom_call.1} parent=1 // pred_check
      %p35 = pneg %p34
    $region23: #{tpu_custom_call.1} parent=1 // pred_check_branch
      %37 = sbr.rel (%p35) target = $region25
    $region24: #{tpu_custom_call.1} parent=1 // pred_region
      %38 = vst [vmem:[#allocation2] sm:$0x1] 0.0
      %39 = vst [vmem:[#allocation3] sm:$0x1] 0.0
    $region25: #{tpu_custom_call.1} parent=1 // pred_fallthru
      _
    %v40 = vld [vmem:[%s1] sm:$0x1]
    %v41 = vld [vmem:[#allocation5] sm:$0xff]
    %v43 = vlaneseq
    %v44 = vshrl.u32 %v43, 7
    %v45 = vsub.s32 0, %v44
    %v46 = vrot.slane %v40, %v45
    %v48 = vsub.f32 %v41, %v46
    %s49 = smul.u32 0, 8
    %v50 = vlaneseq
    %v51 = vand.u32 %v50, 127
    %v52 = vstv %s49
    %v53 = vadd.s32 %v52, %v51
    %vm54 = vcmp.lt.s32.totalorder %v53, 2
    %v55 = vsel %vm54, 1, 0
    %v56 = vcvt.s32.f32 %v55
    %v57 = vld [vmem:[#allocation2] sm:$0x1]
    %vm58 = vcmask 64512
    %v60 = vsel %vm58, %v56, 0
    %62 = vmatprep.subr.mxu0 0.0
    %63 = vmatpush1.msra.mxu0 %v48
    %64 = vmatprep.subr.mxu0 0.0
    %65 = vmatpush1.msra.mxu0 0.0
    %66 = vmatprep.subr.mxu0 0.0
    %67 = vmatpush1.msra.mxu0 0.0
    %68 = vmatprep.subr.mxu0 0.0
    %69 = vmatpush1.msra.mxu0 0.0
    %70 = vmatprep.subr.mxu0 0.0
    %71 = vmatpush1.msra.mxu0 0.0
    %72 = vmatprep.subr.mxu0 0.0
    %73 = vmatpush1.msra.mxu0 0.0
    %74 = vmatprep.subr.mxu0 0.0
    %75 = vmatpush1.msra.mxu0 0.0
    %76 = vmatprep.subr.mxu0 0.0
    %77 = vmatpush1.msra.mxu0 0.0
    %78 = vmatprep.subr.mxu0 0.0
    %79 = vmatpush1.msra.mxu0 0.0
    %80 = vmatprep.subr.mxu0 0.0
    %81 = vmatpush1.msra.mxu0 0.0
    %82 = vmatprep.subr.mxu0 0.0
    %83 = vmatpush1.msra.mxu0 0.0
    %84 = vmatprep.subr.mxu0 0.0
    %85 = vmatpush1.msra.mxu0 0.0
    %86 = vmatprep.subr.mxu0 0.0
    %87 = vmatpush1.msra.mxu0 0.0
    %88 = vmatprep.subr.mxu0 0.0
    %89 = vmatpush1.msra.mxu0 0.0
    %90 = vmatprep.subr.mxu0 0.0
    %91 = vmatpush1.msra.mxu0 0.0
    %92 = vmatprep.subr.mxu0 0.0
    %93 = vmatpush1.msra.mxu0 0.0
    %94 = vmatprep.subr.mxu0 0.0
    %95 = vmatpush1.msra.mxu0 0.0
    %96 = vmatprep.subr.mxu0 0.0
    %97 = vmatpush1.msra.mxu0 0.0
    %98 = vmatprep.subr.mxu0 0.0
    %99 = vmatpush1.msra.mxu0 0.0
    %100 = vmatprep.subr.mxu0 0.0
    %101 = vmatpush1.msra.mxu0 0.0
    %102 = vmatprep.subr.mxu0 0.0
    %103 = vmatpush1.msra.mxu0 0.0
    %104 = vmatprep.subr.mxu0 0.0
    %105 = vmatpush1.msra.mxu0 0.0
    %106 = vmatprep.subr.mxu0 0.0
    %107 = vmatpush1.msra.mxu0 0.0
    %108 = vmatprep.subr.mxu0 0.0
    %109 = vmatpush1.msra.mxu0 0.0
    %110 = vmatprep.subr.mxu0 0.0
    %111 = vmatpush1.msra.mxu0 0.0
    %112 = vmatprep.subr.mxu0 0.0
    %113 = vmatpush1.msra.mxu0 0.0
    %114 = vmatprep.subr.mxu0 0.0
    %115 = vmatpush1.msra.mxu0 0.0
    %116 = vmatprep.subr.mxu0 0.0
    %117 = vmatpush1.msra.mxu0 0.0
    %118 = vmatprep.subr.mxu0 0.0
    %119 = vmatpush1.msra.mxu0 0.0
    %120 = vmatprep.subr.mxu0 0.0
    %121 = vmatpush1.msra.mxu0 0.0
    %122 = vmatprep.subr.mxu0 0.0
    %123 = vmatpush1.msra.mxu0 0.0
    %124 = vmatprep.subr.mxu0 0.0
    %125 = vmatpush1.msra.mxu0 0.0
    %126 = vmatprep.mubr.f32.mxu0 0.0
    %127 = vmatmul.mubr.f32.gmra.mrb[0].mxu0 %v60
    %v128 = vpop.f32.mrb[0].mxu0
    %v129 = vadd.f32 0.0, %v128
    %v130 = vpop.f32.mrb[0].mxu0
    %131 = vdwg.mxu0
    %v132 = vadd.f32 %v57, %v129
    %133 = vst [vmem:[#allocation2] sm:$0x1] %v132
    %v134 = vld [vmem:[#allocation3] sm:$0x1]
    %v135 = vmul.f32 %v48, %v48
    %136 = vmatprep.subr.mxu0 0.0
    %137 = vmatpush1.msra.mxu0 %v135
    %138 = vmatprep.subr.mxu0 0.0
    %139 = vmatpush1.msra.mxu0 0.0
    %140 = vmatprep.subr.mxu0 0.0
    %141 = vmatpush1.msra.mxu0 0.0
    %142 = vmatprep.subr.mxu0 0.0
    %143 = vmatpush1.msra.mxu0 0.0
    %144 = vmatprep.subr.mxu0 0.0
    %145 = vmatpush1.msra.mxu0 0.0
    %146 = vmatprep.subr.mxu0 0.0
    %147 = vmatpush1.msra.mxu0 0.0
    %148 = vmatprep.subr.mxu0 0.0
    %149 = vmatpush1.msra.mxu0 0.0
    %150 = vmatprep.subr.mxu0 0.0
    %151 = vmatpush1.msra.mxu0 0.0
    %152 = vmatprep.subr.mxu0 0.0
    %153 = vmatpush1.msra.mxu0 0.0
    %154 = vmatprep.subr.mxu0 0.0
    %155 = vmatpush1.msra.mxu0 0.0
    %156 = vmatprep.subr.mxu0 0.0
    %157 = vmatpush1.msra.mxu0 0.0
    %158 = vmatprep.subr.mxu0 0.0
    %159 = vmatpush1.msra.mxu0 0.0
    %160 = vmatprep.subr.mxu0 0.0
    %161 = vmatpush1.msra.mxu0 0.0
    %162 = vmatprep.subr.mxu0 0.0
    %163 = vmatpush1.msra.mxu0 0.0
    %164 = vmatprep.subr.mxu0 0.0
    %165 = vmatpush1.msra.mxu0 0.0
    %166 = vmatprep.subr.mxu0 0.0
    %167 = vmatpush1.msra.mxu0 0.0
    %168 = vmatprep.subr.mxu0 0.0
    %169 = vmatpush1.msra.mxu0 0.0
    %170 = vmatprep.subr.mxu0 0.0
    %171 = vmatpush1.msra.mxu0 0.0
    %172 = vmatprep.subr.mxu0 0.0
    %173 = vmatpush1.msra.mxu0 0.0
    %174 = vmatprep.subr.mxu0 0.0
    %175 = vmatpush1.msra.mxu0 0.0
    %176 = vmatprep.subr.mxu0 0.0
    %177 = vmatpush1.msra.mxu0 0.0
    %178 = vmatprep.subr.mxu0 0.0
    %179 = vmatpush1.msra.mxu0 0.0
    %180 = vmatprep.subr.mxu0 0.0
    %181 = vmatpush1.msra.mxu0 0.0
    %182 = vmatprep.subr.mxu0 0.0
    %183 = vmatpush1.msra.mxu0 0.0
    %184 = vmatprep.subr.mxu0 0.0
    %185 = vmatpush1.msra.mxu0 0.0
    %186 = vmatprep.subr.mxu0 0.0
    %187 = vmatpush1.msra.mxu0 0.0
    %188 = vmatprep.subr.mxu0 0.0
    %189 = vmatpush1.msra.mxu0 0.0
    %190 = vmatprep.subr.mxu0 0.0
    %191 = vmatpush1.msra.mxu0 0.0
    %192 = vmatprep.subr.mxu0 0.0
    %193 = vmatpush1.msra.mxu0 0.0
    %194 = vmatprep.subr.mxu0 0.0
    %195 = vmatpush1.msra.mxu0 0.0
    %196 = vmatprep.subr.mxu0 0.0
    %197 = vmatpush1.msra.mxu0 0.0
    %198 = vmatprep.subr.mxu0 0.0
    %199 = vmatpush1.msra.mxu0 0.0
    %200 = vmatprep.mubr.f32.mxu0 0.0
    %201 = vmatmul.mubr.f32.gmra.mrb[0].mxu0 %v60
    %v202 = vpop.f32.mrb[0].mxu0
    %v203 = vadd.f32 0.0, %v202
    %v204 = vpop.f32.mrb[0].mxu0
    %205 = vdwg.mxu0
    %v206 = vadd.f32 %v134, %v203
    %207 = vst [vmem:[#allocation3] sm:$0x1] %v206
    // Predicated region
    $region26: #{tpu_custom_call.1} parent=1 // pred_check
      %p208 = pneg %p34
    $region27: #{tpu_custom_call.1} parent=1 // pred_check_branch
      %210 = sbr.rel (%p208) target = $region29
    $region28: #{tpu_custom_call.1} parent=1 // pred_region
      %v211 = vld [vmem:[#allocation2] sm:$0x1]
      %v212 = vld [vmem:[#allocation3] sm:$0x1]
      %213 = vrot.lane.b32.xlu0 %v211, 32
      %v214 = vpop.permute.xlu0 %213
      %v215 = vadd.f32 %v211, %v214
      %216 = vrot.lane.b32.xlu0 %v212, 32
      %v217 = vpop.permute.xlu0 %216
      %v218 = vadd.f32 %v212, %v217
      %219 = vrot.lane.b32.xlu0 %v215, 64
      %v220 = vpop.permute.xlu0 %219
      %v221 = vadd.f32 %v215, %v220
      %222 = vrot.lane.b32.xlu0 %v218, 64
      %v223 = vpop.permute.xlu0 %222
      %v224 = vadd.f32 %v218, %v223
      %v225 = vrcp.pop 8.0
      %v226 = vmul.f32 %v221, %v225
      %v227 = vadd.f32 %v40, %v226
      %v228 = vmul.f32 %v221, %v221
      %v229 = vmul.f32 %v228, %v225
      %v230 = vsub.f32 %v224, %v229
      %v231 = vrcp.pop 7.0
      %v232 = vmul.f32 %v230, %v231
      %v233 = vld [vmem:[%s1] sm:$0x1]
      %v234 = vld [vmem:[%s2] sm:$0x1]
      %s235 = sld [smem:[#allocation4]]
      %v236 = vsub.f32 %v227, %v233
      %s237 = sadd.f32 %s235, 8.0
      %v238 = vmul.f32 %v236, 8.0
      %v239 = vstv %s237
      %v240 = vrcp.pop %v239
      %v241 = vmul.f32 %v238, %v240
      %v242 = vadd.f32 %v233, %v241
      %v243 = vstv %s235
      %v244 = vmul.f32 %v234, %v243
      %v245 = vmul.f32 %v232, 8.0
      %v246 = vadd.f32 %v244, %v245
      %v247 = vmul.f32 %v236, %v236
      %v248 = vmul.f32 %v247, %v243
      %v249 = vmul.f32 %v248, 8.0
      %v250 = vmul.f32 %v249, %v240
      %v251 = vadd.f32 %v246, %v250
      %252 = vst [vmem:[#allocation8] sm:$0x1] %v242
      %v253 = vmul.f32 %v251, %v240
      %254 = vst [vmem:[#allocation9] sm:$0x1] %v253
    $region29: #{tpu_custom_call.1} parent=1 // pred_fallthru
      _
    // Predicated region
    $region30: #{tpu_custom_call.1} parent=1 // pred_check
      _
    $region31: #{tpu_custom_call.1} parent=1 // pred_check_branch
      %256 = sbr.rel (0) target = $region33
    $region32: #{tpu_custom_call.1} parent=1 // pred_region
      %s258 = ssub.s32 16, 16
      %259 = vsyncadd [#allocation7], %s258
      %s261 = sshll.u32 [#allocation8], 4
      %s262 = int_to_ptr.vmem [resolvable:$true] %s261
      %264 = dma.vmem_to_hbm [thread:$0]  %s262, 16, %s4, [#allocation7]
    $region33: #{tpu_custom_call.1} parent=1 // pred_fallthru
      _
    // Predicated region
    $region34: #{tpu_custom_call.1} parent=1 // pred_check
      _
    $region35: #{tpu_custom_call.1} parent=1 // pred_check_branch
      %266 = sbr.rel (0) target = $region37
    $region36: #{tpu_custom_call.1} parent=1 // pred_region
      %s268 = ssub.s32 16, 16
      %269 = vsyncadd [#allocation10], %s268
      %s271 = sshll.u32 [#allocation9], 4
      %s272 = int_to_ptr.vmem [resolvable:$true] %s271
      %274 = dma.vmem_to_hbm [thread:$0]  %s272, 16, %s5, [#allocation10]
    $region37: #{tpu_custom_call.1} parent=1 // pred_fallthru
      _
    // Predicated region
    $region38: #{tpu_custom_call.1} parent=1 // pred_check
      _
    $region39: #{tpu_custom_call.1} parent=1 // pred_check_branch
      %276 = sbr.rel (0) target = $region41
    $region40: #{tpu_custom_call.1} parent=1 // pred_region
      %277 = dma.done [#allocation7], 16
    $region41: #{tpu_custom_call.1} parent=1 // pred_fallthru
      _
    // Predicated region
    $region42: #{tpu_custom_call.1} parent=1 // pred_check
      _
    $region43: #{tpu_custom_call.1} parent=1 // pred_check_branch
      %279 = sbr.rel (0) target = $region45
    $region44: #{tpu_custom_call.1} parent=1 // pred_region
      %280 = dma.done [#allocation10], 16
    $region45: #{tpu_custom_call.1} parent=1 // pred_fallthru
      _
    %281 = vsyncpa [#allocation6], 1
    %282 = vsyncpa [#allocation7], 1
    %283 = vsyncpa [#allocation10], 1

</llo_original>
